<compile_context>
chip_gen: v7x
topology: tpu7x:2x2x1
jax: 0.10.0
libtpu: 0.0.40
codegen_flags: <defaults>
</compile_context>

<pallas_src>
import functools
import math

import jax
import jax.numpy as jnp
from jax.experimental import pallas as pl
from jax.experimental.pallas import tpu as pltpu


# ------------------------------ kernel body -------------------------------

def _threshold_kernel(x_ref, o_ref, *, threshold, logit, compute_dtype):
    """(sigmoid(x) > threshold) in one elementwise pass.

    For 0 < threshold < 1 the exact monotone rewrite
        sigmoid(x) > t  <=>  x > log(t / (1 - t))
    makes this a single VPU compare (no EUP exp).  For degenerate thresholds
    (t <= 0 or t >= 1) sigmoid is computed explicitly so boundary semantics
    match PyTorch.
    """
    x = x_ref[...].astype(compute_dtype)
    if logit is not None:
        pred = x > logit                     # python float stays weakly typed
    else:
        pred = jax.nn.sigmoid(x) > threshold
    o_ref[...] = pred.astype(o_ref.dtype)


# --------------------------- hardware heuristics ---------------------------

def _device_kind():
    try:
        return jax.devices()[0].device_kind.lower()
    except Exception:
        return ""


def _tensorcores_per_chip():
    # Only v7x has 2 TensorCores per chip; v5e / v6e have 1.
    return 2 if "v7" in _device_kind() else 1


def _has_bf16_valu():
    # v6e / v7x VPUs run bf16 natively; v5e does not.
    kind = _device_kind()
    return ("v6" in kind) or ("v7" in kind)


# ------------------------------ block sizing -------------------------------

_TOTAL_VMEM_BUDGET = 16 * 1024 * 1024   # double-buffered in+out bytes per grid step
_VMEM_LIMIT_BYTES = 32 * 1024 * 1024    # raise v5e's 16 MiB scoped default; safe on
                                        # v6e (128 MiB phys) and v7x (64 MiB phys)
_MAX_COLS = 4096                        # lane-dense slab width cap (multiple of 128)


def _sublane(dtype):
    # f32 -> 8, bf16 -> 16, int8/bool -> 32 sublane packing multiple.
    return max(8, 32 // jnp.dtype(dtype).itemsize)


def _pick_cols(total):
    """Largest multiple of 128 (<= _MAX_COLS) that divides `total`, else None."""
    k = _MAX_COLS // 128
    while k >= 1:
        c = k * 128
        if total % c == 0:
            return c
        k -= 1
    return None


def _round_up(v, m):
    return ((v + m - 1) // m) * m


def _run_threshold_2d(x2d, out_dtype, *, threshold, logit, compute_dtype):
    rows, cols = x2d.shape
    in_bytes = jnp.dtype(x2d.dtype).itemsize
    out_bytes = jnp.dtype(out_dtype).itemsize
    align = max(_sublane(x2d.dtype), _sublane(out_dtype))
    num_tc = _tensorcores_per_chip()

    # Block rows from the real double-buffered in+out footprint.
    bytes_per_elem = 2 * (in_bytes + out_bytes)
    block_elems = _TOTAL_VMEM_BUDGET // bytes_per_elem
    block_rows = max(align, (block_elems // cols) // align * align)

    if block_rows >= rows:
        block_rows = rows                              # single full-extent block
        if num_tc > 1 and rows >= num_tc * align:
            # v7x: split a single-block case so both TensorCores get work.
            split = _round_up(pl.cdiv(rows, num_tc), align)
            if split < rows:
                block_rows = split
    elif num_tc > 1:
        # v7x: make the step count a multiple of the TensorCore count so the
        # 'parallel' grid axis is evenly balanced across cores.
        steps = pl.cdiv(rows, block_rows)
        if steps % num_tc:
            target = _round_up(steps, num_tc)
            block_rows = max(align, _round_up(pl.cdiv(rows, target), align))

    grid = (pl.cdiv(rows, block_rows),)  # ragged last block is masked by Pallas

    kernel = functools.partial(
        _threshold_kernel,
        threshold=threshold, logit=logit, compute_dtype=compute_dtype)

    return pl.pallas_call(
        kernel,
        out_shape=jax.ShapeDtypeStruct((rows, cols), out_dtype),
        grid_spec=pltpu.PrefetchScalarGridSpec(
            num_scalar_prefetch=0,
            grid=grid,
            in_specs=[pl.BlockSpec((block_rows, cols), lambda i: (i, 0))],
            out_specs=pl.BlockSpec((block_rows, cols), lambda i: (i, 0)),
        ),
        compiler_params=pltpu.CompilerParams(
            dimension_semantics=("parallel",),
            vmem_limit_bytes=_VMEM_LIMIT_BYTES,
        ),
    )(x2d)


# --------------------------------- wrapper ---------------------------------

def out_sigmoid(x, threshold=0.5, *, out_dtype=jnp.float32):
    """OutSigmoid.forward: (sigmoid(x) > threshold) cast to `out_dtype`.

    Works for any input shape (elementwise op).  `threshold` must be a static
    Python number, mirroring the PyTorch module's constructor argument.
    `out_dtype` defaults to float32 (PyTorch's ThresholdTaker .float()); pass
    bf16/int8 to cut HBM write traffic if the consumer allows it.
    """
    threshold = float(threshold)
    if 0.0 < threshold < 1.0:
        logit = math.log(threshold / (1.0 - threshold))   # exact monotone rewrite
    else:
        logit = None                                      # compute sigmoid in-kernel

    in_dtype = jnp.dtype(x.dtype)
    if logit is not None and in_dtype == jnp.bfloat16 and _has_bf16_valu():
        compute_dtype = jnp.bfloat16      # native bf16 compare on v6e/v7x
    else:
        compute_dtype = jnp.float32       # f32 inputs (no-op) / v5e bf16 / others

    run = functools.partial(_run_threshold_2d, out_dtype=out_dtype,
                            threshold=threshold, logit=logit,
                            compute_dtype=compute_dtype)

    total = x.size
    flat = x.reshape(-1)

    cols = _pick_cols(total)
    if cols is not None:
        # Common case: element count divisible by 128 -> one lane-dense pass
        # over HBM, no pad, no slice.
        return run(flat.reshape(total // cols, cols)).reshape(x.shape)

    # Fallback (element count not a multiple of 128): lane-dense kernel over
    # the divisible prefix + a tiny full-extent-block kernel for the tail.
    # No whole-tensor pad / slice, so HBM traffic stays ~1 read + 1 write.
    prefix = (total // 128) * 128
    parts = []
    if prefix:
        pcols = _pick_cols(prefix)
        parts.append(run(flat[:prefix].reshape(prefix // pcols, pcols)).reshape(-1))
    tail = flat[prefix:]
    if tail.size:
        # (1, tail) block equals the full array dims, so it is exempt from the
        # (8, 128) tiling rule; <128 elements, negligible cost.
        parts.append(run(tail.reshape(1, tail.size)).reshape(-1))
    out = parts[0] if len(parts) == 1 else jnp.concatenate(parts)
    return out.reshape(x.shape)


# ----------------------------------- test -----------------------------------

if __name__ == "__main__":
    key = jax.random.PRNGKey(0)
    # Small NCHW input consistent with a binary-segmentation head output.
    x = jax.random.normal(key, (2, 4, 16, 16), dtype=jnp.float32)

    out = jax.block_until_ready(out_sigmoid(x, threshold=0.5))

    # Reference in plain JAX.  The kernel uses the exact rewrite
    # sigmoid(x) > 0.5 <=> x > 0; the only possible discrepancy is when f32
    # sigmoid rounds exactly onto the threshold, so exempt |x| ~ 0.
    ref = (jax.nn.sigmoid(x) > 0.5).astype(jnp.float32)
    agree = (out == ref) | (jnp.abs(x) < 1e-6)
    assert out.shape == x.shape
    assert out.dtype == jnp.float32
    assert bool(jnp.all(agree))

    # Exercise the non-128-divisible fallback (prefix + tail) once.
    x2 = jax.random.normal(jax.random.PRNGKey(0), (3, 5, 43), dtype=jnp.float32)
    out2 = jax.block_until_ready(out_sigmoid(x2, threshold=0.3))
    ref2 = (jax.nn.sigmoid(x2) > 0.3).astype(jnp.float32)
    boundary = jnp.abs(x2 - math.log(0.3 / 0.7)) < 1e-5
    assert out2.shape == x2.shape
    assert bool(jnp.all((out2 == ref2) | boundary))

    print("KERNEL_OK")
</pallas_src>

<mosaic_0001>
module attributes {stable_mosaic.version = 11 : i64} {
  func.func @_threshold_kernel(%arg0: i32, %arg1: memref<1x2048xf32, #tpu.memory_space<vmem>>, %arg2: memref<1x2048xf32, #tpu.memory_space<vmem>>) attributes {dimension_semantics = [#tpu.dimension_semantics<parallel>], iteration_bounds = array<i64: 1>, scalar_prefetch = 0 : i64, scratch_operands = 0 : i64, tpu.core_type = #tpu.core_type<tc>, window_params = [{transform_indices = @transform_0, window_bounds = array<i64: 1, 2048>}, {transform_indices = @transform_1, window_bounds = array<i64: 1, 2048>}]} {
    %c0 = arith.constant 0 : index
    %c0_0 = arith.constant 0 : index
    %0 = vector.load %arg1[%c0, %c0_0] : memref<1x2048xf32, #tpu.memory_space<vmem>>, vector<1x2048xf32>
    %cst = arith.constant 0.000000e+00 : f32
    %1 = vector.broadcast %cst : f32 to vector<1x2048xf32>
    %2 = arith.cmpf ogt, %0, %1 : vector<1x2048xf32>
    %3 = arith.extui %2 : vector<1x2048xi1> to vector<1x2048xi32>
    %4 = arith.sitofp %3 : vector<1x2048xi32> to vector<1x2048xf32>
    %c0_1 = arith.constant 0 : index
    %c0_2 = arith.constant 0 : index
    %5 = vector.load %arg2[%c0_1, %c0_2] : memref<1x2048xf32, #tpu.memory_space<vmem>>, vector<1x2048xf32>
    tpu.vector_store %arg2[%c0_1, %c0_2], %4 {strides = array<i32>} : memref<1x2048xf32, #tpu.memory_space<vmem>>, vector<1x2048xf32>,
    return
  }
  func.func @transform_0(%arg0: i32) -> (i32, i32) {
    %c0_i32 = arith.constant 0 : i32
    %c0_i32_0 = arith.constant 0 : i32
    return %arg0, %c0_i32 : i32, i32
  }
  func.func @transform_1(%arg0: i32) -> (i32, i32) {
    %c0_i32 = arith.constant 0 : i32
    %c0_i32_0 = arith.constant 0 : i32
    return %arg0, %c0_i32 : i32, i32
  }
}

</mosaic_0001>

<llo_original>
// kernel: tpu_custom_call.1
$region0: #{tpu_custom_call.1}
  #allocation0 [shape = 'u32[]', space=smem, size = 0x4, offset = 0x4, fixed_abs, tag = 'smem constant byte address 0x4 - core index']
  #allocation1 [shape = 'u32[144,128]{1,0:T(1,128)}', space=vmem, size = 0x12000, scoped, tag = 'internal scratch']
  %s0 = inlined_call_operand.hbm [shape: f32[1,2048], index: 0, kind: input, shape index: {}]
  %s1 = inlined_call_operand.hbm [shape: f32[1,2048], index: 1, kind: output, shape index: {}]
  %s2 = sld [smem:[#allocation0]]
  $region18: #{tpu_custom_call.1} parent=0
    _
  %s4 = ssub.s32 1, %s2
  %s5 = scalar_select 0, %s4, %s2
  $region1: #{tpu_custom_call.1} parent=0
    #allocation2 [shape = 'u8[8192]{0}', space=vmem, size = 0x2000, scoped, tag = 'input window, operand 0, single buffered']
    #allocation3 [shape = 's32[1]{0}', space=sflag, size = 0x4, scoped, tag = 'scoped memory for tpu_custom_call.1']
    #allocation4 [shape = 's32[1]{0}', space=sflag, size = 0x4, scoped, tag = 'scoped memory for tpu_custom_call.1']
    #allocation5 [shape = 'u8[8192]{0}', space=vmem, size = 0x2000, scoped, tag = 'output window, operand 0, single buffered']
    %6 = vsyncpa [#allocation3], 0
    %7 = vsyncpa [#allocation4], 0
    // Predicated region
    $region2: #{tpu_custom_call.1} parent=1 // pred_check
      _
    $region3: #{tpu_custom_call.1} parent=1 // pred_check_branch
      %9 = sbr.rel (0) target = $region5
    $region4: #{tpu_custom_call.1} parent=1 // pred_region
      %s11 = ssub.s32 256, 256
      %12 = vsyncadd [#allocation3], %s11
      %s14 = sshll.u32 [#allocation2], 4
      %s15 = int_to_ptr.vmem [resolvable:$true] %s14
      %17 = dma.hbm_to_vmem [thread:$0]  %s0, 256, %s15, [#allocation3]
    $region5: #{tpu_custom_call.1} parent=1 // pred_fallthru
      _
    // Predicated region
    $region6: #{tpu_custom_call.1} parent=1 // pred_check
      _
    $region7: #{tpu_custom_call.1} parent=1 // pred_check_branch
      %19 = sbr.rel (0) target = $region9
    $region8: #{tpu_custom_call.1} parent=1 // pred_region
      %20 = dma.done [#allocation3], 256
    $region9: #{tpu_custom_call.1} parent=1 // pred_fallthru
      _
    %v21 = vld [vmem:[#allocation2] sm:$0xff]
    %v22 = vld [vmem:[#allocation2 + $0x8] sm:$0xff]
    %vm23 = vcmp.gt.f32.partialorder %v21, 0.0
    %vm24 = vcmp.gt.f32.partialorder %v22, 0.0
    %v25 = vsel %vm23, 1, 0
    %v26 = vsel %vm24, 1, 0
    %v27 = vcvt.s32.f32 %v25
    %v28 = vcvt.s32.f32 %v26
    %29 = vst [vmem:[#allocation5] sm:$0xff] %v27
    %30 = vst [vmem:[#allocation5 + $0x8] sm:$0xff] %v28
    // Predicated region
    $region10: #{tpu_custom_call.1} parent=1 // pred_check
      _
    $region11: #{tpu_custom_call.1} parent=1 // pred_check_branch
      %32 = sbr.rel (0) target = $region13
    $region12: #{tpu_custom_call.1} parent=1 // pred_region
      %s34 = ssub.s32 256, 256
      %35 = vsyncadd [#allocation4], %s34
      %s37 = sshll.u32 [#allocation5], 4
      %s38 = int_to_ptr.vmem [resolvable:$true] %s37
      %40 = dma.vmem_to_hbm [thread:$0]  %s38, 256, %s1, [#allocation4]
    $region13: #{tpu_custom_call.1} parent=1 // pred_fallthru
      _
    // Predicated region
    $region14: #{tpu_custom_call.1} parent=1 // pred_check
      _
    $region15: #{tpu_custom_call.1} parent=1 // pred_check_branch
      %42 = sbr.rel (0) target = $region17
    $region16: #{tpu_custom_call.1} parent=1 // pred_region
      %43 = dma.done [#allocation4], 256
    $region17: #{tpu_custom_call.1} parent=1 // pred_fallthru
      _
    %44 = vsyncpa [#allocation3], 1
    %45 = vsyncpa [#allocation4], 1

</llo_original>
